<compile_context>
chip_gen: v7x
topology: tpu7x:2x2x1
jax: 0.10.0
libtpu: 0.0.40
codegen_flags: <defaults>
</compile_context>

<pallas_src>
import functools

import jax
import jax.numpy as jnp
from jax.experimental import pallas as pl
from jax.experimental.pallas import tpu as pltpu

_LANE = 128


def _round_up(n, m):
    return ((n + m - 1) // m) * m


def _cdiv(a, b):
    return -(-a // b)


def _num_tensorcores():
    """2 on v7x-class parts (2 TCs/chip), 1 on v5e/v6e.  Best-effort."""
    try:
        kind = jax.devices()[0].device_kind.lower()
    except Exception:
        return 1
    return 2 if "v7" in kind else 1


# --------------------------------------------------------------------------
# Kernel: one batch tile, fully fused fc1 -> ReLU -> fc2 -> ReLU -> fc3.
# Dropout is identity in eval mode.
# TODO(synk): training-mode dropout (pltpu.prng_random_bits mask) not wired in.
# --------------------------------------------------------------------------
def _mlp_kernel(x_ref, w1_ref, b1_ref, w2_ref, b2_ref, w3_ref, b3_ref, o_ref):
    x = x_ref[...].astype(w1_ref.dtype)
    h1 = jnp.dot(x, w1_ref[...], preferred_element_type=jnp.float32) + b1_ref[...]
    h1 = jnp.maximum(h1, 0.0)
    h2 = jnp.dot(h1.astype(w2_ref.dtype), w2_ref[...],
                 preferred_element_type=jnp.float32) + b2_ref[...]
    h2 = jnp.maximum(h2, 0.0)
    out = jnp.dot(h2.astype(w3_ref.dtype), w3_ref[...],
                  preferred_element_type=jnp.float32) + b3_ref[...]
    o_ref[...] = out.astype(o_ref.dtype)


# --------------------------------------------------------------------------
# One-time parameter preparation (hoisted out of the per-call forward).
#   * hidden dims H1/H2 padded to 128 lanes (exact: zero rows/cols/bias lanes)
#   * D_in / D_out left unpadded (full-dim blocks in the kernel)
#   * weights optionally cast to bf16; biases stay f32 for the f32 epilogue
# --------------------------------------------------------------------------
def prepare_static_mlp_params(w1, b1, w2, b2, w3, b3, *, use_bf16=False):
    def _bias2d(b):
        return b.reshape(1, -1) if b.ndim == 1 else b

    b1, b2, b3 = _bias2d(b1), _bias2d(b2), _bias2d(b3)
    D_in, H1 = w1.shape
    H2 = w2.shape[1]
    D_out = w3.shape[1]
    H1_p = _round_up(H1, _LANE)
    H2_p = _round_up(H2, _LANE)

    comp_dtype = jnp.bfloat16 if use_bf16 else w1.dtype

    w1_p = jnp.pad(w1, ((0, 0), (0, H1_p - H1))).astype(comp_dtype)
    w2_p = jnp.pad(w2, ((0, H1_p - H1), (0, H2_p - H2))).astype(comp_dtype)
    w3_p = jnp.pad(w3, ((0, H2_p - H2), (0, 0))).astype(comp_dtype)
    b1_p = jnp.pad(b1, ((0, 0), (0, H1_p - H1))).astype(jnp.float32)
    b2_p = jnp.pad(b2, ((0, 0), (0, H2_p - H2))).astype(jnp.float32)
    b3_p = b3.astype(jnp.float32)
    return w1_p, b1_p, w2_p, b2_p, w3_p, b3_p


# --------------------------------------------------------------------------
# Forward: batch-tiled grid, weights resident (single-buffered), f32 epilogue.
# --------------------------------------------------------------------------
@functools.partial(jax.jit, static_argnames=("max_block_b",))
def static_mlp_forward(x, w1_p, b1_p, w2_p, b2_p, w3_p, b3_p, *, max_block_b=512):
    B, D_in = x.shape
    H1_p = w1_p.shape[1]
    H2_p = w2_p.shape[1]
    D_out = w3_p.shape[1]
    out_dtype = x.dtype
    comp_dtype = w1_p.dtype
    comp_bytes = jnp.dtype(comp_dtype).itemsize

    # ---- batch tile selection: balanced tiles, sublane-packed rows ----
    sub = 16 if comp_dtype == jnp.bfloat16 else 8
    n_tiles = max(1, _cdiv(B, max_block_b))
    block_b = _round_up(_cdiv(B, n_tiles), sub)
    # Only split for the 2nd TensorCore on v7x, and only if halves stay large.
    if _num_tensorcores() >= 2 and _cdiv(B, block_b) < 2 and block_b >= 512:
        block_b = _round_up(block_b // 2, sub)
    B_p = _round_up(B, block_b)
    grid = (B_p // block_b,)

    x_p = x if B_p == B else jnp.pad(x, ((0, B_p - B), (0, 0)))

    # ---- BlockSpecs: batch tiled; weights/biases grid-invariant, 1-buffered ----
    resident = dict(pipeline_mode=pl.Buffered(1))
    in_specs = [
        pl.BlockSpec((block_b, D_in), lambda i: (i, 0)),                  # x tile
        pl.BlockSpec((D_in, H1_p), lambda i: (0, 0), **resident),         # w1
        pl.BlockSpec((1, H1_p), lambda i: (0, 0), **resident),            # b1
        pl.BlockSpec((H1_p, H2_p), lambda i: (0, 0), **resident),         # w2
        pl.BlockSpec((1, H2_p), lambda i: (0, 0), **resident),            # b2
        pl.BlockSpec((H2_p, D_out), lambda i: (0, 0), **resident),        # w3
        pl.BlockSpec((1, D_out), lambda i: (0, 0), **resident),           # b3
    ]
    out_spec = pl.BlockSpec((block_b, D_out), lambda i: (i, 0))

    # ---- VMEM budget (resident weights 1x, streamed tiles 2x, intermediates) ----
    weight_bytes = (D_in * H1_p + H1_p * H2_p + H2_p * D_out) * comp_bytes
    bias_bytes = (H1_p + H2_p + D_out) * 4
    x_tile_bytes = 2 * block_b * D_in * jnp.dtype(x.dtype).itemsize
    out_tile_bytes = 2 * block_b * D_out * jnp.dtype(out_dtype).itemsize
    interm_bytes = 2 * block_b * (H1_p + H2_p) * 4
    vmem_needed = (weight_bytes + bias_bytes + x_tile_bytes
                   + out_tile_bytes + interm_bytes)
    vmem_limit = int(min(100 * 2**20, max(2 * vmem_needed + (2 << 20), 16 << 20)))

    flops = 2 * B_p * (D_in * H1_p + H1_p * H2_p + H2_p * D_out)
    bytes_accessed = (
        B_p * D_in * jnp.dtype(x.dtype).itemsize
        + weight_bytes + bias_bytes
        + B_p * D_out * jnp.dtype(out_dtype).itemsize
    )

    out_p = pl.pallas_call(
        _mlp_kernel,
        out_shape=jax.ShapeDtypeStruct((B_p, D_out), out_dtype),
        grid_spec=pltpu.PrefetchScalarGridSpec(
            num_scalar_prefetch=0,
            grid=grid,
            in_specs=in_specs,
            out_specs=out_spec,
        ),
        compiler_params=pltpu.CompilerParams(
            dimension_semantics=("parallel",),
            vmem_limit_bytes=vmem_limit,
        ),
        cost_estimate=pl.CostEstimate(
            flops=flops, transcendentals=0, bytes_accessed=bytes_accessed),
    )(x_p, w1_p, b1_p, w2_p, b2_p, w3_p, b3_p)

    return out_p if B_p == B else out_p[:B]


def init_linear(key, fan_in, fan_out, dtype=jnp.float32):
    """torch.nn.Linear-style init: U(-1/sqrt(fan_in), +1/sqrt(fan_in)).

    Weight returned as [fan_in, fan_out] (already transposed vs. PyTorch)."""
    kw, kb = jax.random.split(key)
    bound = 1.0 / jnp.sqrt(fan_in)
    w = jax.random.uniform(kw, (fan_in, fan_out), dtype, -bound, bound)
    b = jax.random.uniform(kb, (1, fan_out), dtype, -bound, bound)
    return w, b


if __name__ == "__main__":
    # StaticMLP(input_dim=32, hidden_dim1=64, hidden_dim2=32, output_dim=16,
    #           dropout_rate=0.1) -- dropout is identity in eval mode.
    input_dim, hidden_dim1, hidden_dim2, output_dim = 32, 64, 32, 16
    batch = 16

    key = jax.random.PRNGKey(0)
    kx, k1, k2, k3 = jax.random.split(key, 4)

    x = jax.random.normal(kx, (batch, input_dim), jnp.float32)
    w1, b1 = init_linear(k1, input_dim, hidden_dim1)
    w2, b2 = init_linear(k2, hidden_dim1, hidden_dim2)
    w3, b3 = init_linear(k3, hidden_dim2, output_dim)

    # Pure-JAX reference (eval-mode semantics).
    ref = jnp.maximum(x @ w1 + b1, 0.0)
    ref = jnp.maximum(ref @ w2 + b2, 0.0)
    ref = ref @ w3 + b3

    # f32 path: exact.
    params_f32 = prepare_static_mlp_params(w1, b1, w2, b2, w3, b3, use_bf16=False)
    out = static_mlp_forward(x, *params_f32)
    out = jax.block_until_ready(out)
    assert out.shape == (batch, output_dim)
    assert jnp.allclose(out, ref, atol=1e-5, rtol=1e-5)

    # bf16-weight path (v6e/v7x bandwidth lever): x is quantized to bf16 for
    # the first matmul inside the kernel, so the tolerance is loose.
    params_bf16 = prepare_static_mlp_params(w1, b1, w2, b2, w3, b3, use_bf16=True)
    out_bf16 = static_mlp_forward(x, *params_bf16)
    out_bf16 = jax.block_until_ready(out_bf16)
    assert out_bf16.shape == (batch, output_dim)
    assert jnp.allclose(out_bf16, ref, atol=1e-1, rtol=1e-1)

    print("KERNEL_OK")
</pallas_src>

<mosaic_0001>
module attributes {stable_mosaic.version = 11 : i64} {
  func.func @_mlp_kernel(%arg0: i32, %arg1: memref<16x32xf32, #tpu.memory_space<vmem>>, %arg2: memref<32x128xf32, #tpu.memory_space<vmem>>, %arg3: memref<1x128xf32, #tpu.memory_space<vmem>>, %arg4: memref<128x128xf32, #tpu.memory_space<vmem>>, %arg5: memref<1x128xf32, #tpu.memory_space<vmem>>, %arg6: memref<128x16xf32, #tpu.memory_space<vmem>>, %arg7: memref<1x16xf32, #tpu.memory_space<vmem>>, %arg8: memref<16x16xf32, #tpu.memory_space<vmem>>) attributes {dimension_semantics = [#tpu.dimension_semantics<parallel>], iteration_bounds = array<i64: 1>, scalar_prefetch = 0 : i64, scratch_operands = 0 : i64, tpu.core_type = #tpu.core_type<tc>, window_params = [{transform_indices = @transform_0, window_bounds = array<i64: 16, 32>}, {pipeline_mode = #tpu.pipeline_mode<synchronous>, transform_indices = @transform_1, window_bounds = array<i64: 32, 128>}, {pipeline_mode = #tpu.pipeline_mode<synchronous>, transform_indices = @transform_2, window_bounds = array<i64: 1, 128>}, {pipeline_mode = #tpu.pipeline_mode<synchronous>, transform_indices = @transform_3, window_bounds = array<i64: 128, 128>}, {pipeline_mode = #tpu.pipeline_mode<synchronous>, transform_indices = @transform_4, window_bounds = array<i64: 1, 128>}, {pipeline_mode = #tpu.pipeline_mode<synchronous>, transform_indices = @transform_5, window_bounds = array<i64: 128, 16>}, {pipeline_mode = #tpu.pipeline_mode<synchronous>, transform_indices = @transform_6, window_bounds = array<i64: 1, 16>}, {transform_indices = @transform_7, window_bounds = array<i64: 16, 16>}]} {
    %c0 = arith.constant 0 : index
    %c0_0 = arith.constant 0 : index
    %0 = vector.load %arg1[%c0, %c0_0] : memref<16x32xf32, #tpu.memory_space<vmem>>, vector<16x32xf32>
    %c0_1 = arith.constant 0 : index
    %c0_2 = arith.constant 0 : index
    %1 = vector.load %arg2[%c0_1, %c0_2] : memref<32x128xf32, #tpu.memory_space<vmem>>, vector<32x128xf32>
    %cst = arith.constant dense<0.000000e+00> : vector<16x128xf32>
    %2 = tpu.matmul %0, %1, %cst {dimension_numbers = #tpu.dot_dimension_numbers<[1], [0], [0], [1], [0, 0, 1, 1], [], []>} : vector<16x32xf32>, vector<32x128xf32>, vector<16x128xf32> -> vector<16x128xf32>
    %c0_3 = arith.constant 0 : index
    %c0_4 = arith.constant 0 : index
    %3 = vector.load %arg3[%c0_3, %c0_4] : memref<1x128xf32, #tpu.memory_space<vmem>>, vector<1x128xf32>
    %4 = vector.broadcast %3 : vector<1x128xf32> to vector<16x128xf32>
    %5 = arith.addf %2, %4 : vector<16x128xf32>
    %cst_5 = arith.constant 0.000000e+00 : f32
    %6 = vector.broadcast %cst_5 : f32 to vector<16x128xf32>
    %7 = arith.maximumf %5, %6 : vector<16x128xf32>
    %c0_6 = arith.constant 0 : index
    %c0_7 = arith.constant 0 : index
    %8 = vector.load %arg4[%c0_6, %c0_7] : memref<128x128xf32, #tpu.memory_space<vmem>>, vector<128x128xf32>
    %cst_8 = arith.constant dense<0.000000e+00> : vector<16x128xf32>
    %9 = tpu.matmul %7, %8, %cst_8 {dimension_numbers = #tpu.dot_dimension_numbers<[1], [0], [0], [1], [0, 0, 1, 1], [], []>} : vector<16x128xf32>, vector<128x128xf32>, vector<16x128xf32> -> vector<16x128xf32>
    %c0_9 = arith.constant 0 : index
    %c0_10 = arith.constant 0 : index
    %10 = vector.load %arg5[%c0_9, %c0_10] : memref<1x128xf32, #tpu.memory_space<vmem>>, vector<1x128xf32>
    %11 = vector.broadcast %10 : vector<1x128xf32> to vector<16x128xf32>
    %12 = arith.addf %9, %11 : vector<16x128xf32>
    %cst_11 = arith.constant 0.000000e+00 : f32
    %13 = vector.broadcast %cst_11 : f32 to vector<16x128xf32>
    %14 = arith.maximumf %12, %13 : vector<16x128xf32>
    %c0_12 = arith.constant 0 : index
    %c0_13 = arith.constant 0 : index
    %15 = vector.load %arg6[%c0_12, %c0_13] : memref<128x16xf32, #tpu.memory_space<vmem>>, vector<128x16xf32>
    %cst_14 = arith.constant dense<0.000000e+00> : vector<16x16xf32>
    %16 = tpu.matmul %14, %15, %cst_14 {dimension_numbers = #tpu.dot_dimension_numbers<[1], [0], [0], [1], [0, 0, 1, 1], [], []>} : vector<16x128xf32>, vector<128x16xf32>, vector<16x16xf32> -> vector<16x16xf32>
    %c0_15 = arith.constant 0 : index
    %c0_16 = arith.constant 0 : index
    %17 = vector.load %arg7[%c0_15, %c0_16] : memref<1x16xf32, #tpu.memory_space<vmem>>, vector<1x16xf32>
    %18 = vector.broadcast %17 : vector<1x16xf32> to vector<16x16xf32>
    %19 = arith.addf %16, %18 : vector<16x16xf32>
    %c0_17 = arith.constant 0 : index
    %c0_18 = arith.constant 0 : index
    %20 = vector.load %arg8[%c0_17, %c0_18] : memref<16x16xf32, #tpu.memory_space<vmem>>, vector<16x16xf32>
    tpu.vector_store %arg8[%c0_17, %c0_18], %19 {strides = array<i32>} : memref<16x16xf32, #tpu.memory_space<vmem>>, vector<16x16xf32>,
    return
  }
  func.func @transform_0(%arg0: i32) -> (i32, i32) {
    %c0_i32 = arith.constant 0 : i32
    %c0_i32_0 = arith.constant 0 : i32
    return %arg0, %c0_i32 : i32, i32
  }
  func.func @transform_1(%arg0: i32) -> (i32, i32) {
    %c0_i32 = arith.constant 0 : i32
    %c0_i32_0 = arith.constant 0 : i32
    %c0_i32_1 = arith.constant 0 : i32
    return %c0_i32, %c0_i32_0 : i32, i32
  }
  func.func @transform_2(%arg0: i32) -> (i32, i32) {
    %c0_i32 = arith.constant 0 : i32
    %c0_i32_0 = arith.constant 0 : i32
    %c0_i32_1 = arith.constant 0 : i32
    return %c0_i32, %c0_i32_0 : i32, i32
  }
  func.func @transform_3(%arg0: i32) -> (i32, i32) {
    %c0_i32 = arith.constant 0 : i32
    %c0_i32_0 = arith.constant 0 : i32
    %c0_i32_1 = arith.constant 0 : i32
    return %c0_i32, %c0_i32_0 : i32, i32
  }
  func.func @transform_4(%arg0: i32) -> (i32, i32) {
    %c0_i32 = arith.constant 0 : i32
    %c0_i32_0 = arith.constant 0 : i32
    %c0_i32_1 = arith.constant 0 : i32
    return %c0_i32, %c0_i32_0 : i32, i32
  }
  func.func @transform_5(%arg0: i32) -> (i32, i32) {
    %c0_i32 = arith.constant 0 : i32
    %c0_i32_0 = arith.constant 0 : i32
    %c0_i32_1 = arith.constant 0 : i32
    return %c0_i32, %c0_i32_0 : i32, i32
  }
  func.func @transform_6(%arg0: i32) -> (i32, i32) {
    %c0_i32 = arith.constant 0 : i32
    %c0_i32_0 = arith.constant 0 : i32
    %c0_i32_1 = arith.constant 0 : i32
    return %c0_i32, %c0_i32_0 : i32, i32
  }
  func.func @transform_7(%arg0: i32) -> (i32, i32) {
    %c0_i32 = arith.constant 0 : i32
    %c0_i32_0 = arith.constant 0 : i32
    return %arg0, %c0_i32 : i32, i32
  }
}

</mosaic_0001>

<llo_original>
// kernel: static_mlp_forward.1
$region0: #{static_mlp_forward.1}
  #allocation0 [shape = 'u32[]', space=smem, size = 0x4, offset = 0x4, fixed_abs, tag = 'smem constant byte address 0x4 - core index']
  #allocation1 [shape = 'u32[144,128]{1,0:T(1,128)}', space=vmem, size = 0x12000, scoped, tag = 'internal scratch']
  %s0 = inlined_call_operand.vmem [shape: f32[16,32], index: 0, kind: input, shape index: {}]
  %s1 = inlined_call_operand.hbm [shape: f32[32,128], index: 1, kind: input, shape index: {}]
  %s2 = inlined_call_operand.vmem [shape: f32[1,128], index: 2, kind: input, shape index: {}]
  %s3 = inlined_call_operand.vmem [shape: f32[128,128], index: 3, kind: input, shape index: {}]
  %s4 = inlined_call_operand.vmem [shape: f32[1,128], index: 4, kind: input, shape index: {}]
  %s5 = inlined_call_operand.vmem [shape: f32[128,16], index: 5, kind: input, shape index: {}]
  %s6 = inlined_call_operand.vmem [shape: f32[1,16], index: 6, kind: input, shape index: {}]
  %s7 = inlined_call_operand.hbm [shape: f32[16,16], index: 7, kind: output, shape index: {}]
  %s8 = sld [smem:[#allocation0]]
  $region42: #{static_mlp_forward.1} parent=0
    _
  %s10 = ssub.s32 1, %s8
  %s11 = scalar_select 0, %s10, %s8
  $region1: #{static_mlp_forward.1} parent=0
    #allocation2 [shape = 'u8[16384]{0}', space=vmem, size = 0x4000, scoped, tag = 'input window, operand 1, single buffered']
    #allocation3 [shape = 's32[1]{0}', space=sflag, size = 0x4, scoped, tag = 'scoped memory for static_mlp_forward.1']
    #allocation4 [shape = 's32[1]{0}', space=sflag, size = 0x4, scoped, tag = 'scoped memory for static_mlp_forward.1']
    #allocation5 [shape = 'u8[8192]{0}', space=vmem, size = 0x2000, scoped, tag = 'output window, operand 0, single buffered']
    %12 = vsyncpa [#allocation3], 0
    %13 = vsyncpa [#allocation4], 0
    // Predicated region
    $region2: #{static_mlp_forward.1} parent=1 // pred_check
      _
    $region3: #{static_mlp_forward.1} parent=1 // pred_check_branch
      %15 = sbr.rel (0) target = $region5
    $region4: #{static_mlp_forward.1} parent=1 // pred_region
      _
    $region5: #{static_mlp_forward.1} parent=1 // pred_fallthru
      _
    // Predicated region
    $region6: #{static_mlp_forward.1} parent=1 // pred_check
      _
    $region7: #{static_mlp_forward.1} parent=1 // pred_check_branch
      %17 = sbr.rel (0) target = $region9
    $region8: #{static_mlp_forward.1} parent=1 // pred_region
      %s19 = ssub.s32 512, 512
      %20 = vsyncadd [#allocation3], %s19
      %s21 = sshll.u32 [#allocation2], 4
      %s22 = int_to_ptr.vmem [resolvable:$true] %s21
      %27 = dma.hbm_to_vmem [thread:$0]  %s1, 512, %s22, [#allocation3], 128, 128, 8
    $region9: #{static_mlp_forward.1} parent=1 // pred_fallthru
      _
    // Predicated region
    $region10: #{static_mlp_forward.1} parent=1 // pred_check
      _
    $region11: #{static_mlp_forward.1} parent=1 // pred_check_branch
      %29 = sbr.rel (0) target = $region13
    $region12: #{static_mlp_forward.1} parent=1 // pred_region
      _
    $region13: #{static_mlp_forward.1} parent=1 // pred_fallthru
      _
    // Predicated region
    $region14: #{static_mlp_forward.1} parent=1 // pred_check
      _
    $region15: #{static_mlp_forward.1} parent=1 // pred_check_branch
      %31 = sbr.rel (0) target = $region17
    $region16: #{static_mlp_forward.1} parent=1 // pred_region
      _
    $region17: #{static_mlp_forward.1} parent=1 // pred_fallthru
      _
    // Predicated region
    $region18: #{static_mlp_forward.1} parent=1 // pred_check
      _
    $region19: #{static_mlp_forward.1} parent=1 // pred_check_branch
      %33 = sbr.rel (0) target = $region21
    $region20: #{static_mlp_forward.1} parent=1 // pred_region
      _
    $region21: #{static_mlp_forward.1} parent=1 // pred_fallthru
      _
    // Predicated region
    $region22: #{static_mlp_forward.1} parent=1 // pred_check
      _
    $region23: #{static_mlp_forward.1} parent=1 // pred_check_branch
      %35 = sbr.rel (0) target = $region25
    $region24: #{static_mlp_forward.1} parent=1 // pred_region
      _
    $region25: #{static_mlp_forward.1} parent=1 // pred_fallthru
      _
    // Predicated region
    $region26: #{static_mlp_forward.1} parent=1 // pred_check
      _
    $region27: #{static_mlp_forward.1} parent=1 // pred_check_branch
      %37 = sbr.rel (0) target = $region29
    $region28: #{static_mlp_forward.1} parent=1 // pred_region
      _
    $region29: #{static_mlp_forward.1} parent=1 // pred_fallthru
      _
    // Predicated region
    $region30: #{static_mlp_forward.1} parent=1 // pred_check
      _
    $region31: #{static_mlp_forward.1} parent=1 // pred_check_branch
      %39 = sbr.rel (0) target = $region33
    $region32: #{static_mlp_forward.1} parent=1 // pred_region
      %40 = dma.done [#allocation3], 512
    $region33: #{static_mlp_forward.1} parent=1 // pred_fallthru
      _
    %v41 = vld [vmem:[%s0] sm:$0xff]
    %v42 = vld [vmem:[%s0 + $0x8] sm:$0xff]
    %v43 = vld [vmem:[#allocation2] sm:$0xff]
    %v44 = vld [vmem:[#allocation2 + $0x8] sm:$0xff]
    %v45 = vld [vmem:[#allocation2 + $0x10] sm:$0xff]
    %v46 = vld [vmem:[#allocation2 + $0x18] sm:$0xff]
    %v47 = vld [vmem:[%s2] sm:$0x1]
    %v49 = vlaneseq
    %v50 = vshrl.u32 %v49, 7
    %v51 = vsub.s32 0, %v50
    %v52 = vrot.slane %v47, %v51
    %vm54 = vcmask 261120
    %v56 = vsel %vm54, %v41, 0
    %v59 = vsel %vm54, %v42, 0
    %61 = vmatprep.subr.mxu0 0.0
    %62 = vmatpush1.msra.mxu0 %v43
    %63 = vmatprep.subr.mxu0 0.0
    %64 = vmatpush1.msra.mxu0 %v44
    %65 = vmatprep.subr.mxu0 0.0
    %66 = vmatpush1.msra.mxu0 %v45
    %67 = vmatprep.subr.mxu0 0.0
    %68 = vmatpush1.msra.mxu0 %v46
    %69 = vmatprep.subr.mxu0 0.0
    %70 = vmatpush1.msra.mxu0 0.0
    %71 = vmatprep.subr.mxu0 0.0
    %72 = vmatpush1.msra.mxu0 0.0
    %73 = vmatprep.subr.mxu0 0.0
    %74 = vmatpush1.msra.mxu0 0.0
    %75 = vmatprep.subr.mxu0 0.0
    %76 = vmatpush1.msra.mxu0 0.0
    %77 = vmatprep.subr.mxu0 0.0
    %78 = vmatpush1.msra.mxu0 0.0
    %79 = vmatprep.subr.mxu0 0.0
    %80 = vmatpush1.msra.mxu0 0.0
    %81 = vmatprep.subr.mxu0 0.0
    %82 = vmatpush1.msra.mxu0 0.0
    %83 = vmatprep.subr.mxu0 0.0
    %84 = vmatpush1.msra.mxu0 0.0
    %85 = vmatprep.subr.mxu0 0.0
    %86 = vmatpush1.msra.mxu0 0.0
    %87 = vmatprep.subr.mxu0 0.0
    %88 = vmatpush1.msra.mxu0 0.0
    %89 = vmatprep.subr.mxu0 0.0
    %90 = vmatpush1.msra.mxu0 0.0
    %91 = vmatprep.subr.mxu0 0.0
    %92 = vmatpush1.msra.mxu0 0.0
    %93 = vmatprep.subr.mxu0 0.0
    %94 = vmatpush1.msra.mxu0 0.0
    %95 = vmatprep.subr.mxu0 0.0
    %96 = vmatpush1.msra.mxu0 0.0
    %97 = vmatprep.subr.mxu0 0.0
    %98 = vmatpush1.msra.mxu0 0.0
    %99 = vmatprep.subr.mxu0 0.0
    %100 = vmatpush1.msra.mxu0 0.0
    %101 = vmatprep.subr.mxu0 0.0
    %102 = vmatpush1.msra.mxu0 0.0
    %103 = vmatprep.subr.mxu0 0.0
    %104 = vmatpush1.msra.mxu0 0.0
    %105 = vmatprep.subr.mxu0 0.0
    %106 = vmatpush1.msra.mxu0 0.0
    %107 = vmatprep.subr.mxu0 0.0
    %108 = vmatpush1.msra.mxu0 0.0
    %109 = vmatprep.subr.mxu0 0.0
    %110 = vmatpush1.msra.mxu0 0.0
    %111 = vmatprep.subr.mxu0 0.0
    %112 = vmatpush1.msra.mxu0 0.0
    %113 = vmatprep.subr.mxu0 0.0
    %114 = vmatpush1.msra.mxu0 0.0
    %115 = vmatprep.subr.mxu0 0.0
    %116 = vmatpush1.msra.mxu0 0.0
    %117 = vmatprep.subr.mxu0 0.0
    %118 = vmatpush1.msra.mxu0 0.0
    %119 = vmatprep.subr.mxu0 0.0
    %120 = vmatpush1.msra.mxu0 0.0
    %121 = vmatprep.subr.mxu0 0.0
    %122 = vmatpush1.msra.mxu0 0.0
    %123 = vmatprep.subr.mxu0 0.0
    %124 = vmatpush1.msra.mxu0 0.0
    %125 = vmatprep.mubr.f32.mxu0 0.0
    %126 = vmatmul.mubr.f32.gmra.mrb[0].mxu0 %v56
    %v127 = vpop.f32.mrb[0].mxu0
    %v128 = vadd.f32 %v52, %v127
    %v129 = vpop.f32.mrb[0].mxu0
    %130 = vmatprep.mubr.f32.mxu0 0.0
    %131 = vmatmul.mubr.f32.gmra.mrb[0].mxu0 %v59
    %v132 = vpop.f32.mrb[0].mxu0
    %v133 = vadd.f32 %v52, %v132
    %v134 = vpop.f32.mrb[0].mxu0
    %135 = vdwg.mxu0
    %v136 = vmax.f32 %v128, 0.0
    %v137 = vmax.f32 %v133, 0.0
    %v138 = vld [vmem:[%s3] sm:$0xff]
    %v139 = vld [vmem:[%s3 + $0x8] sm:$0xff]
    %v140 = vld [vmem:[%s3 + $0x10] sm:$0xff]
    %v141 = vld [vmem:[%s3 + $0x18] sm:$0xff]
    %v142 = vld [vmem:[%s3 + $0x20] sm:$0xff]
    %v143 = vld [vmem:[%s3 + $0x28] sm:$0xff]
    %v144 = vld [vmem:[%s3 + $0x30] sm:$0xff]
    %v145 = vld [vmem:[%s3 + $0x38] sm:$0xff]
    %v146 = vld [vmem:[%s3 + $0x40] sm:$0xff]
    %v147 = vld [vmem:[%s3 + $0x48] sm:$0xff]
    %v148 = vld [vmem:[%s3 + $0x50] sm:$0xff]
    %v149 = vld [vmem:[%s3 + $0x58] sm:$0xff]
    %v150 = vld [vmem:[%s3 + $0x60] sm:$0xff]
    %v151 = vld [vmem:[%s3 + $0x68] sm:$0xff]
    %v152 = vld [vmem:[%s3 + $0x70] sm:$0xff]
    %v153 = vld [vmem:[%s3 + $0x78] sm:$0xff]
    %v154 = vld [vmem:[%s4] sm:$0x1]
    %v156 = vlaneseq
    %v157 = vshrl.u32 %v156, 7
    %v158 = vsub.s32 0, %v157
    %v159 = vrot.slane %v154, %v158
    %161 = vmatprep.subr.mxu0 0.0
    %162 = vmatpush1.msra.mxu0 %v138
    %163 = vmatprep.subr.mxu0 0.0
    %164 = vmatpush1.msra.mxu0 %v139
    %165 = vmatprep.subr.mxu0 0.0
    %166 = vmatpush1.msra.mxu0 %v140
    %167 = vmatprep.subr.mxu0 0.0
    %168 = vmatpush1.msra.mxu0 %v141
    %169 = vmatprep.subr.mxu0 0.0
    %170 = vmatpush1.msra.mxu0 %v142
    %171 = vmatprep.subr.mxu0 0.0
    %172 = vmatpush1.msra.mxu0 %v143
    %173 = vmatprep.subr.mxu0 0.0
    %174 = vmatpush1.msra.mxu0 %v144
    %175 = vmatprep.subr.mxu0 0.0
    %176 = vmatpush1.msra.mxu0 %v145
    %177 = vmatprep.subr.mxu0 0.0
    %178 = vmatpush1.msra.mxu0 %v146
    %179 = vmatprep.subr.mxu0 0.0
    %180 = vmatpush1.msra.mxu0 %v147
    %181 = vmatprep.subr.mxu0 0.0
    %182 = vmatpush1.msra.mxu0 %v148
    %183 = vmatprep.subr.mxu0 0.0
    %184 = vmatpush1.msra.mxu0 %v149
    %185 = vmatprep.subr.mxu0 0.0
    %186 = vmatpush1.msra.mxu0 %v150
    %187 = vmatprep.subr.mxu0 0.0
    %188 = vmatpush1.msra.mxu0 %v151
    %189 = vmatprep.subr.mxu0 0.0
    %190 = vmatpush1.msra.mxu0 %v152
    %191 = vmatprep.subr.mxu0 0.0
    %192 = vmatpush1.msra.mxu0 %v153
    %193 = vmatprep.subr.mxu0 0.0
    %194 = vmatpush1.msra.mxu0 0.0
    %195 = vmatprep.subr.mxu0 0.0
    %196 = vmatpush1.msra.mxu0 0.0
    %197 = vmatprep.subr.mxu0 0.0
    %198 = vmatpush1.msra.mxu0 0.0
    %199 = vmatprep.subr.mxu0 0.0
    %200 = vmatpush1.msra.mxu0 0.0
    %201 = vmatprep.subr.mxu0 0.0
    %202 = vmatpush1.msra.mxu0 0.0
    %203 = vmatprep.subr.mxu0 0.0
    %204 = vmatpush1.msra.mxu0 0.0
    %205 = vmatprep.subr.mxu0 0.0
    %206 = vmatpush1.msra.mxu0 0.0
    %207 = vmatprep.subr.mxu0 0.0
    %208 = vmatpush1.msra.mxu0 0.0
    %209 = vmatprep.subr.mxu0 0.0
    %210 = vmatpush1.msra.mxu0 0.0
    %211 = vmatprep.subr.mxu0 0.0
    %212 = vmatpush1.msra.mxu0 0.0
    %213 = vmatprep.subr.mxu0 0.0
    %214 = vmatpush1.msra.mxu0 0.0
    %215 = vmatprep.subr.mxu0 0.0
    %216 = vmatpush1.msra.mxu0 0.0
    %217 = vmatprep.subr.mxu0 0.0
    %218 = vmatpush1.msra.mxu0 0.0
    %219 = vmatprep.subr.mxu0 0.0
    %220 = vmatpush1.msra.mxu0 0.0
    %221 = vmatprep.subr.mxu0 0.0
    %222 = vmatpush1.msra.mxu0 0.0
    %223 = vmatprep.subr.mxu0 0.0
    %224 = vmatpush1.msra.mxu0 0.0
    %225 = vmatprep.mubr.f32.mxu0 0.0
    %226 = vmatmul.mubr.f32.gmra.mrb[0].mxu0 %v136
    %v227 = vpop.f32.mrb[0].mxu0
    %v228 = vadd.f32 %v159, %v227
    %v229 = vpop.f32.mrb[0].mxu0
    %230 = vmatprep.mubr.f32.mxu0 0.0
    %231 = vmatmul.mubr.f32.gmra.mrb[0].mxu0 %v137
    %v232 = vpop.f32.mrb[0].mxu0
    %v233 = vadd.f32 %v159, %v232
    %v234 = vpop.f32.mrb[0].mxu0
    %235 = vdwg.mxu0
    %v236 = vmax.f32 %v228, 0.0
    %v237 = vmax.f32 %v233, 0.0
    %v238 = vld [vmem:[%s5] sm:$0xff]
    %v239 = vld [vmem:[%s5 + $0x8] sm:$0xff]
    %v240 = vld [vmem:[%s5 + $0x10] sm:$0xff]
    %v241 = vld [vmem:[%s5 + $0x18] sm:$0xff]
    %v242 = vld [vmem:[%s5 + $0x20] sm:$0xff]
    %v243 = vld [vmem:[%s5 + $0x28] sm:$0xff]
    %v244 = vld [vmem:[%s5 + $0x30] sm:$0xff]
    %v245 = vld [vmem:[%s5 + $0x38] sm:$0xff]
    %v246 = vld [vmem:[%s5 + $0x40] sm:$0xff]
    %v247 = vld [vmem:[%s5 + $0x48] sm:$0xff]
    %v248 = vld [vmem:[%s5 + $0x50] sm:$0xff]
    %v249 = vld [vmem:[%s5 + $0x58] sm:$0xff]
    %v250 = vld [vmem:[%s5 + $0x60] sm:$0xff]
    %v251 = vld [vmem:[%s5 + $0x68] sm:$0xff]
    %v252 = vld [vmem:[%s5 + $0x70] sm:$0xff]
    %v253 = vld [vmem:[%s5 + $0x78] sm:$0xff]
    %v254 = vld [vmem:[%s6] sm:$0x1]
    %v256 = vlaneseq
    %v257 = vshrl.u32 %v256, 7
    %v258 = vsub.s32 0, %v257
    %v259 = vrot.slane %v254, %v258
    %261 = vmatprep.subr.mxu0 0.0
    %262 = vmatpush1.msra.mxu0 %v238
    %263 = vmatprep.subr.mxu0 0.0
    %264 = vmatpush1.msra.mxu0 %v239
    %265 = vmatprep.subr.mxu0 0.0
    %266 = vmatpush1.msra.mxu0 %v240
    %267 = vmatprep.subr.mxu0 0.0
    %268 = vmatpush1.msra.mxu0 %v241
    %269 = vmatprep.subr.mxu0 0.0
    %270 = vmatpush1.msra.mxu0 %v242
    %271 = vmatprep.subr.mxu0 0.0
    %272 = vmatpush1.msra.mxu0 %v243
    %273 = vmatprep.subr.mxu0 0.0
    %274 = vmatpush1.msra.mxu0 %v244
    %275 = vmatprep.subr.mxu0 0.0
    %276 = vmatpush1.msra.mxu0 %v245
    %277 = vmatprep.subr.mxu0 0.0
    %278 = vmatpush1.msra.mxu0 %v246
    %279 = vmatprep.subr.mxu0 0.0
    %280 = vmatpush1.msra.mxu0 %v247
    %281 = vmatprep.subr.mxu0 0.0
    %282 = vmatpush1.msra.mxu0 %v248
    %283 = vmatprep.subr.mxu0 0.0
    %284 = vmatpush1.msra.mxu0 %v249
    %285 = vmatprep.subr.mxu0 0.0
    %286 = vmatpush1.msra.mxu0 %v250
    %287 = vmatprep.subr.mxu0 0.0
    %288 = vmatpush1.msra.mxu0 %v251
    %289 = vmatprep.subr.mxu0 0.0
    %290 = vmatpush1.msra.mxu0 %v252
    %291 = vmatprep.subr.mxu0 0.0
    %292 = vmatpush1.msra.mxu0 %v253
    %293 = vmatprep.subr.mxu0 0.0
    %294 = vmatpush1.msra.mxu0 0.0
    %295 = vmatprep.subr.mxu0 0.0
    %296 = vmatpush1.msra.mxu0 0.0
    %297 = vmatprep.subr.mxu0 0.0
    %298 = vmatpush1.msra.mxu0 0.0
    %299 = vmatprep.subr.mxu0 0.0
    %300 = vmatpush1.msra.mxu0 0.0
    %301 = vmatprep.subr.mxu0 0.0
    %302 = vmatpush1.msra.mxu0 0.0
    %303 = vmatprep.subr.mxu0 0.0
    %304 = vmatpush1.msra.mxu0 0.0
    %305 = vmatprep.subr.mxu0 0.0
    %306 = vmatpush1.msra.mxu0 0.0
    %307 = vmatprep.subr.mxu0 0.0
    %308 = vmatpush1.msra.mxu0 0.0
    %309 = vmatprep.subr.mxu0 0.0
    %310 = vmatpush1.msra.mxu0 0.0
    %311 = vmatprep.subr.mxu0 0.0
    %312 = vmatpush1.msra.mxu0 0.0
    %313 = vmatprep.subr.mxu0 0.0
    %314 = vmatpush1.msra.mxu0 0.0
    %315 = vmatprep.subr.mxu0 0.0
    %316 = vmatpush1.msra.mxu0 0.0
    %317 = vmatprep.subr.mxu0 0.0
    %318 = vmatpush1.msra.mxu0 0.0
    %319 = vmatprep.subr.mxu0 0.0
    %320 = vmatpush1.msra.mxu0 0.0
    %321 = vmatprep.subr.mxu0 0.0
    %322 = vmatpush1.msra.mxu0 0.0
    %323 = vmatprep.subr.mxu0 0.0
    %324 = vmatpush1.msra.mxu0 0.0
    %325 = vmatprep.mubr.f32.mxu0 0.0
    %326 = vmatmul.mubr.f32.gmra.mrb[0].mxu0 %v236
    %v327 = vpop.f32.mrb[0].mxu0
    %v328 = vadd.f32 %v259, %v327
    %v329 = vpop.f32.mrb[0].mxu0
    %330 = vmatprep.mubr.f32.mxu0 0.0
    %331 = vmatmul.mubr.f32.gmra.mrb[0].mxu0 %v237
    %v332 = vpop.f32.mrb[0].mxu0
    %v333 = vadd.f32 %v259, %v332
    %v334 = vpop.f32.mrb[0].mxu0
    %335 = vdwg.mxu0
    %vm336 = vcmask 130048
    %337 = vst.msk [vmem:[#allocation5] sm:$0xff] %vm336, %v328
    %338 = vst.msk [vmem:[#allocation5 + $0x8] sm:$0xff] %vm336, %v333
    // Predicated region
    $region34: #{static_mlp_forward.1} parent=1 // pred_check
      _
    $region35: #{static_mlp_forward.1} parent=1 // pred_check_branch
      %340 = sbr.rel (0) target = $region37
    $region36: #{static_mlp_forward.1} parent=1 // pred_region
      %s342 = ssub.s32 256, 256
      %343 = vsyncadd [#allocation4], %s342
      %s344 = sshll.u32 [#allocation5], 4
      %s345 = int_to_ptr.vmem [resolvable:$true] %s344
      %350 = dma.vmem_to_hbm [thread:$0]  %s345, 256, %s7, [#allocation4], 128, 128, 8
    $region37: #{static_mlp_forward.1} parent=1 // pred_fallthru
      _
    // Predicated region
    $region38: #{static_mlp_forward.1} parent=1 // pred_check
      _
    $region39: #{static_mlp_forward.1} parent=1 // pred_check_branch
      %352 = sbr.rel (0) target = $region41
    $region40: #{static_mlp_forward.1} parent=1 // pred_region
      %353 = dma.done [#allocation4], 256
    $region41: #{static_mlp_forward.1} parent=1 // pred_fallthru
      _
    %354 = vsyncpa [#allocation3], 1
    %355 = vsyncpa [#allocation4], 1

</llo_original>
